<compile_context>
chip_gen: v6e
topology: v6e:2x2x1
jax: 0.10.0
libtpu: 0.0.40
codegen_flags: <defaults>
</compile_context>

<pallas_src>
import jax
import jax.numpy as jnp
from jax import lax
from jax.experimental import pallas as pl
from jax.experimental.pallas import tpu as pltpu

_EPS = 1e-5
_PAD = 8                       # sublane-aligned left pad for the conv halo scratch
_VMEM_LIMIT = 32 * 1024 * 1024  # explicit scoped-VMEM budget (safe on v5e/v6e/v7x)


def _pick_row_tile(h, target=8):
    """Largest divisor of h that is <= target (row-tile height)."""
    t = min(h, target)
    while h % t:
        t -= 1
    return t


# ----------------------------------------------------------------------------
# Kernel S: per-channel sum / sum-of-squares accumulator (for BN batch stats)
# ----------------------------------------------------------------------------
def _stats_kernel(x_ref, sum_ref, sq_ref):
    @pl.when((pl.program_id(0) == 0) & (pl.program_id(1) == 0))
    def _init():
        sum_ref[...] = jnp.zeros_like(sum_ref)
        sq_ref[...] = jnp.zeros_like(sq_ref)

    x = x_ref[0].astype(jnp.float32)                      # (th, W, C)
    sum_ref[...] += jnp.sum(x, axis=(0, 1)).reshape(1, -1)
    sq_ref[...] += jnp.sum(x * x, axis=(0, 1)).reshape(1, -1)


def channel_stats(x):
    """Per-channel mean and 1/sqrt(var+eps) over (N,H,W) of an NHWC tensor."""
    n, h, w, c = x.shape
    th = _pick_row_tile(h)
    sums, sqs = pl.pallas_call(
        _stats_kernel,
        out_shape=(jax.ShapeDtypeStruct((1, c), jnp.float32),
                   jax.ShapeDtypeStruct((1, c), jnp.float32)),
        grid=(n, h // th),
        in_specs=[pl.BlockSpec((1, th, w, c), lambda i, r: (i, r, 0, 0))],
        out_specs=(pl.BlockSpec((1, c), lambda i, r: (0, 0)),
                   pl.BlockSpec((1, c), lambda i, r: (0, 0))),
        compiler_params=pltpu.CompilerParams(
            dimension_semantics=("arbitrary", "arbitrary"),
            vmem_limit_bytes=_VMEM_LIMIT),
    )(x)
    count = float(n * h * w)
    mean = sums[0] / count
    var = sqs[0] / count - mean * mean                    # biased variance (PyTorch BN)
    inv = lax.rsqrt(var + _EPS)
    return mean, inv


# ----------------------------------------------------------------------------
# Kernel C1: fused BN+ReLU + 3x3 "same" conv (+ optional fused residual add)
# grid = (N, row_tiles); the whole image stays VMEM-resident across row tiles,
# BN+ReLU+halo-padding is done once per image into a VMEM scratch (pl.when r==0).
# ----------------------------------------------------------------------------
def _make_conv3x3_kernel(h, w, th, cout, has_residual):
    def kernel(x_ref, s_ref, b_ref, w_ref, *rest):
        if has_residual:
            r_ref, o_ref, pad_ref = rest
        else:
            o_ref, pad_ref = rest
        rt = pl.program_id(1)

        @pl.when(rt == 0)
        def _prep():                                      # once per image
            pad_ref[...] = jnp.zeros_like(pad_ref)
            a = (x_ref[0].astype(jnp.float32) * s_ref[...].reshape(1, 1, -1)
                 + b_ref[...].reshape(1, 1, -1))
            pad_ref[1:h + 1, _PAD:_PAD + w, :] = jnp.maximum(a, 0.0)

        row0 = rt * th
        acc = jnp.zeros((th, w, cout), jnp.float32)
        for dh in range(3):
            for dw in range(3):
                win = pad_ref[pl.ds(row0 + dh, th),
                              _PAD - 1 + dw:_PAD - 1 + dw + w, :]
                acc = acc + jnp.dot(win.astype(jnp.bfloat16), w_ref[dh, dw],
                                    preferred_element_type=jnp.float32)
        if has_residual:
            acc = acc + r_ref[0].astype(jnp.float32)
        o_ref[0] = acc.astype(o_ref.dtype)

    return kernel


def bnrelu_conv3x3(x, scale, shift, w_bf16, residual=None):
    """out = conv3x3_same(relu(x * scale + shift)) [+ residual]   (NHWC)."""
    n, h, w, cin = x.shape
    cout = w_bf16.shape[-1]
    th = _pick_row_tile(h)
    kernel = _make_conv3x3_kernel(h, w, th, cout, residual is not None)

    in_specs = [
        pl.BlockSpec((1, h, w, cin), lambda i, r: (i, 0, 0, 0)),   # resident / image
        pl.BlockSpec((1, cin), lambda i, r: (0, 0)),
        pl.BlockSpec((1, cin), lambda i, r: (0, 0)),
        pl.BlockSpec((3, 3, cin, cout), lambda i, r: (0, 0, 0, 0)),
    ]
    args = [x, scale.reshape(1, cin), shift.reshape(1, cin), w_bf16]
    if residual is not None:
        in_specs.append(pl.BlockSpec((1, th, w, cout), lambda i, r: (i, r, 0, 0)))
        args.append(residual)

    return pl.pallas_call(
        kernel,
        out_shape=jax.ShapeDtypeStruct((n, h, w, cout), x.dtype),
        grid=(n, h // th),
        in_specs=in_specs,
        out_specs=pl.BlockSpec((1, th, w, cout), lambda i, r: (i, r, 0, 0)),
        scratch_shapes=[pltpu.VMEM((h + 2, w + _PAD + 8, cin), jnp.float32)],
        compiler_params=pltpu.CompilerParams(
            dimension_semantics=("parallel", "arbitrary"),
            vmem_limit_bytes=_VMEM_LIMIT),
    )(*args)


# ----------------------------------------------------------------------------
# Kernel C2 (upsample=True):
#   fused BN2+ReLU -> ConvTranspose2d(3x3, s=2, p=1, op=1) via sub-pixel phases
#   + fused identity branch BNu+ReLU -> ConvTranspose2d(1x1, s=2, op=1)
# Output layout (N, H, 2, W, 2*Cout); lanes [0:C]=even column, [C:2C]=odd column;
# dim 2 index 0/1 = even/odd row. reshape -> (N, 2H, 2W, Cout) is free (contiguous).
# Packed weights (7, Cin, 2*Cout) are built host-side so no in-kernel interleave
# ops are needed; zero taps never reach the MXU.
# ----------------------------------------------------------------------------
def _make_upsample_kernel(h, w, th):
    def kernel(h_ref, x_ref, s2_ref, b2_ref, su_ref, bu_ref, w_ref, o_ref, pad_ref):
        rt = pl.program_id(1)

        @pl.when(rt == 0)
        def _prep():                                      # once per image
            pad_ref[...] = jnp.zeros_like(pad_ref)
            a = (h_ref[0].astype(jnp.float32) * s2_ref[...].reshape(1, 1, -1)
                 + b2_ref[...].reshape(1, 1, -1))
            pad_ref[0:h, 0:w, :] = jnp.maximum(a, 0.0)

        row0 = rt * th
        bf = jnp.bfloat16
        a00 = pad_ref[pl.ds(row0, th), 0:w, :].astype(bf)          # a[i  , j  ]
        a01 = pad_ref[pl.ds(row0, th), 1:w + 1, :].astype(bf)      # a[i  , j+1]
        a10 = pad_ref[pl.ds(row0 + 1, th), 0:w, :].astype(bf)      # a[i+1, j  ]
        a11 = pad_ref[pl.ds(row0 + 1, th), 1:w + 1, :].astype(bf)  # a[i+1, j+1]

        # identity branch: relu(bn_u(x)) on this row tile (no halo needed)
        xu = (x_ref[0, pl.ds(row0, th), :, :].astype(jnp.float32)
              * su_ref[...].reshape(1, 1, -1) + bu_ref[...].reshape(1, 1, -1))
        xu = jnp.maximum(xu, 0.0).astype(bf)

        f32 = jnp.float32
        even = (jnp.dot(a00, w_ref[0], preferred_element_type=f32)
                + jnp.dot(a01, w_ref[1], preferred_element_type=f32)
                + jnp.dot(xu, w_ref[2], preferred_element_type=f32))
        odd = (jnp.dot(a00, w_ref[3], preferred_element_type=f32)
               + jnp.dot(a01, w_ref[4], preferred_element_type=f32)
               + jnp.dot(a10, w_ref[5], preferred_element_type=f32)
               + jnp.dot(a11, w_ref[6], preferred_element_type=f32))
        o_ref[0, :, 0, :, :] = even.astype(o_ref.dtype)            # even output rows
        o_ref[0, :, 1, :, :] = odd.astype(o_ref.dtype)             # odd output rows

    return kernel


def bnrelu_convT_s2_plus_identity(h1, x, scale2, shift2, scale_u, shift_u, w_packed):
    n, h, w, cin = h1.shape
    c2 = w_packed.shape[-1]           # 2 * Cout
    cout = c2 // 2
    th = _pick_row_tile(h)
    kernel = _make_upsample_kernel(h, w, th)

    y5 = pl.pallas_call(
        kernel,
        out_shape=jax.ShapeDtypeStruct((n, h, 2, w, c2), x.dtype),
        grid=(n, h // th),
        in_specs=[
            pl.BlockSpec((1, h, w, cin), lambda i, r: (i, 0, 0, 0)),   # h1 resident
            pl.BlockSpec((1, h, w, cin), lambda i, r: (i, 0, 0, 0)),   # x  resident
            pl.BlockSpec((1, cin), lambda i, r: (0, 0)),
            pl.BlockSpec((1, cin), lambda i, r: (0, 0)),
            pl.BlockSpec((1, cin), lambda i, r: (0, 0)),
            pl.BlockSpec((1, cin), lambda i, r: (0, 0)),
            pl.BlockSpec((7, cin, c2), lambda i, r: (0, 0, 0)),
        ],
        out_specs=pl.BlockSpec((1, th, 2, w, c2), lambda i, r: (i, r, 0, 0, 0)),
        scratch_shapes=[pltpu.VMEM((h + 1, w + 1, cin), jnp.float32)],
        compiler_params=pltpu.CompilerParams(
            dimension_semantics=("parallel", "arbitrary"),
            vmem_limit_bytes=_VMEM_LIMIT),
    )(h1, x, scale2.reshape(1, cin), shift2.reshape(1, cin),
      scale_u.reshape(1, cin), shift_u.reshape(1, cin), w_packed)
    # free, contiguous reshape: (N, H, 2, W, 2C) -> (N, 2H, 2W, C)
    return y5.reshape(n, 2 * h, 2 * w, cout)


# ----------------------------------------------------------------------------
# The module
# ----------------------------------------------------------------------------
class DecoderResidualLayerPallas:
    def __init__(self, hidden_channels, output_channels, upsample, key):
        self.hidden = hidden_channels
        self.cout = output_channels
        self.upsample = upsample
        ks = jax.random.split(key, 8)

        def bn_params(k):
            k1, k2 = jax.random.split(k)
            gamma = jax.random.uniform(k1, (hidden_channels,), jnp.float32, 0.5, 1.5)
            beta = 0.1 * jax.random.normal(k2, (hidden_channels,), jnp.float32)
            return gamma, beta

        self.g1, self.b1 = bn_params(ks[0])
        self.g2, self.b2 = bn_params(ks[1])
        # weight_layer1 conv3x3 hidden->hidden, stored HWIO (f32 canonical).
        self.w1 = 0.1 * jax.random.normal(
            ks[2], (3, 3, hidden_channels, hidden_channels), jnp.float32)
        self.w1_bf = self.w1.astype(jnp.bfloat16)

        if upsample:
            # ConvTranspose2d(3x3) weights: PyTorch layout (Cin, Cout, kh, kw),
            # converted to the equivalent flipped HWIO conv kernel.
            w2_pt = 0.1 * jax.random.normal(
                ks[3], (hidden_channels, output_channels, 3, 3), jnp.float32)
            self.w2 = jnp.transpose(w2_pt[:, :, ::-1, ::-1], (2, 3, 0, 1))  # (3,3,Ci,Co)
            self.gu, self.bu = bn_params(ks[4])
            wu_pt = 0.1 * jax.random.normal(
                ks[5], (hidden_channels, output_channels, 1, 1), jnp.float32)
            self.wu = jnp.transpose(wu_pt, (2, 3, 0, 1))                    # (1,1,Ci,Co)

            # Sub-pixel packed weights: lanes [0:C] -> even output column,
            # lanes [C:2C] -> odd output column.  Rows of w_up_packed:
            #   0: a00 even-row, 1: a01 even-row, 2: identity (1x1) even-row,
            #   3: a00 odd-row,  4: a01 odd-row,  5: a10 odd-row, 6: a11 odd-row.
            w = self.w2
            wu = self.wu[0, 0]
            z = jnp.zeros_like(wu)
            packs = [
                jnp.concatenate([w[1, 1], w[1, 0]], axis=1),
                jnp.concatenate([z,       w[1, 2]], axis=1),
                jnp.concatenate([wu,      z      ], axis=1),
                jnp.concatenate([w[0, 1], w[0, 0]], axis=1),
                jnp.concatenate([z,       w[0, 2]], axis=1),
                jnp.concatenate([w[2, 1], w[2, 0]], axis=1),
                jnp.concatenate([z,       w[2, 2]], axis=1),
            ]
            self.w_up_packed = jnp.stack(packs, axis=0).astype(jnp.bfloat16)
            self.w2_bf = None
        else:
            self.w2 = 0.1 * jax.random.normal(
                ks[3], (3, 3, hidden_channels, output_channels), jnp.float32)
            self.w2_bf = self.w2.astype(jnp.bfloat16)
            self.gu = self.bu = self.wu = None
            self.w_up_packed = None

    # ---- Pallas forward ------------------------------------------------------
    def __call__(self, x_nchw):
        x = jnp.transpose(x_nchw, (0, 2, 3, 1)).astype(jnp.float32)  # NCHW -> NHWC

        # BN statistics of x (shared by BN1 and, if upsampling, BN_u).
        mean_x, inv_x = channel_stats(x)
        scale1 = self.g1 * inv_x
        shift1 = self.b1 - mean_x * scale1

        # weight_layer1: BN + ReLU + conv3x3 (fused, no residual)
        h1 = bnrelu_conv3x3(x, scale1, shift1, self.w1_bf)

        # BN statistics of h1.
        mean_h, inv_h = channel_stats(h1)
        scale2 = self.g2 * inv_h
        shift2 = self.b2 - mean_h * scale2

        if self.upsample:
            scale_u = self.gu * inv_x
            shift_u = self.bu - mean_x * scale_u
            y = bnrelu_convT_s2_plus_identity(
                h1, x, scale2, shift2, scale_u, shift_u, self.w_up_packed)
        else:
            # weight_layer2 conv3x3 with the residual (identity = x) fused in.
            y = bnrelu_conv3x3(h1, scale2, shift2, self.w2_bf, residual=x)

        return jnp.transpose(y, (0, 3, 1, 2))                        # back to NCHW

    # ---- pure-JAX reference (for verification, f32 everywhere) --------------
    def reference(self, x_nchw):
        x = jnp.transpose(x_nchw, (0, 2, 3, 1)).astype(jnp.float32)

        def bnrelu(v, g, b):
            m = jnp.mean(v, axis=(0, 1, 2), keepdims=True)
            va = jnp.var(v, axis=(0, 1, 2), keepdims=True)
            return jnp.maximum((v - m) / jnp.sqrt(va + _EPS) * g + b, 0.0)

        dn = ("NHWC", "HWIO", "NHWC")
        a1 = bnrelu(x, self.g1, self.b1)
        h1 = lax.conv_general_dilated(a1, self.w1, (1, 1), ((1, 1), (1, 1)),
                                      dimension_numbers=dn)
        a2 = bnrelu(h1, self.g2, self.b2)
        if self.upsample:
            h2 = lax.conv_general_dilated(a2, self.w2, (1, 1), ((1, 2), (1, 2)),
                                          lhs_dilation=(2, 2),
                                          dimension_numbers=dn)
            au = bnrelu(x, self.gu, self.bu)
            ident = lax.conv_general_dilated(au, self.wu, (1, 1),
                                             ((0, 1), (0, 1)),
                                             lhs_dilation=(2, 2),
                                             dimension_numbers=dn)
        else:
            h2 = lax.conv_general_dilated(a2, self.w2, (1, 1), ((1, 1), (1, 1)),
                                          dimension_numbers=dn)
            ident = x
        return jnp.transpose(h2 + ident, (0, 3, 1, 2))


if __name__ == "__main__":
    key = jax.random.PRNGKey(0)
    kx, kp_a, kp_b = jax.random.split(key, 3)

    N, C_HID, H, W = 2, 4, 16, 16
    x = jax.random.normal(kx, (N, C_HID, H, W), jnp.float32)

    # upsample=False (output_channels must equal hidden_channels for the add)
    layer_a = DecoderResidualLayerPallas(C_HID, C_HID, upsample=False, key=kp_a)
    out_a = jax.block_until_ready(layer_a(x))
    assert out_a.shape == (N, C_HID, H, W)
    ref_a = layer_a.reference(x)
    assert bool(jnp.allclose(out_a, ref_a, atol=5e-2, rtol=5e-2)), "upsample=False mismatch"

    # upsample=True (spatial doubles, channels change)
    C_OUT = 8
    layer_b = DecoderResidualLayerPallas(C_HID, C_OUT, upsample=True, key=kp_b)
    out_b = jax.block_until_ready(layer_b(x))
    assert out_b.shape == (N, C_OUT, 2 * H, 2 * W)
    ref_b = layer_b.reference(x)
    assert bool(jnp.allclose(out_b, ref_b, atol=5e-2, rtol=5e-2)), "upsample=True mismatch"

    print("KERNEL_OK")
</pallas_src>

<mosaic_0001>
module attributes {stable_mosaic.version = 11 : i64} {
  func.func @_stats_kernel(%arg0: i32, %arg1: i32, %arg2: memref<1x8x16x4xf32, #tpu.memory_space<vmem>>, %arg3: memref<1x4xf32, #tpu.memory_space<vmem>>, %arg4: memref<1x4xf32, #tpu.memory_space<vmem>>) attributes {dimension_semantics = [#tpu.dimension_semantics<arbitrary>, #tpu.dimension_semantics<arbitrary>], iteration_bounds = array<i64: 2, 2>, scalar_prefetch = 0 : i64, scratch_operands = 0 : i64, tpu.core_type = #tpu.core_type<tc>, window_params = [{transform_indices = @transform_0, window_bounds = array<i64: 1, 8, 16, 4>}, {pipeline_mode = #tpu.pipeline_mode<synchronous>, transform_indices = @transform_1, window_bounds = array<i64: 1, 4>}, {pipeline_mode = #tpu.pipeline_mode<synchronous>, transform_indices = @transform_2, window_bounds = array<i64: 1, 4>}]} {
    %c0_i32 = arith.constant 0 : i32
    %0 = arith.cmpi eq, %arg0, %c0_i32 : i32
    %c0_i32_0 = arith.constant 0 : i32
    %1 = arith.cmpi eq, %arg1, %c0_i32_0 : i32
    %2 = arith.andi %0, %1 : i1
    %3 = arith.extui %2 : i1 to i32
    %c0_i32_1 = arith.constant 0 : i32
    %4 = arith.cmpi ne, %3, %c0_i32_1 : i32
    scf.if %4 {
      %cst_14 = arith.constant 0.000000e+00 : f32
      %18 = vector.broadcast %cst_14 : f32 to vector<1x4xf32>
      %c0_15 = arith.constant 0 : index
      %c0_16 = arith.constant 0 : index
      %19 = vector.load %arg3[%c0_15, %c0_16] : memref<1x4xf32, #tpu.memory_space<vmem>>, vector<1x4xf32>
      tpu.vector_store %arg3[%c0_15, %c0_16], %18 {strides = array<i32>} : memref<1x4xf32, #tpu.memory_space<vmem>>, vector<1x4xf32>,
      %cst_17 = arith.constant 0.000000e+00 : f32
      %20 = vector.broadcast %cst_17 : f32 to vector<1x4xf32>
      %c0_18 = arith.constant 0 : index
      %c0_19 = arith.constant 0 : index
      %21 = vector.load %arg4[%c0_18, %c0_19] : memref<1x4xf32, #tpu.memory_space<vmem>>, vector<1x4xf32>
      tpu.vector_store %arg4[%c0_18, %c0_19], %20 {strides = array<i32>} : memref<1x4xf32, #tpu.memory_space<vmem>>, vector<1x4xf32>,
    } else {
    }
    %c0 = arith.constant 0 : index
    %c0_2 = arith.constant 0 : index
    %c0_3 = arith.constant 0 : index
    %c0_4 = arith.constant 0 : index
    %5 = vector.load %arg2[%c0, %c0_2, %c0_3, %c0_4] : memref<1x8x16x4xf32, #tpu.memory_space<vmem>>, vector<1x8x16x4xf32>
    %6 = vector.shape_cast %5 : vector<1x8x16x4xf32> to vector<8x16x4xf32>
    %c0_5 = arith.constant 0 : index
    %c0_6 = arith.constant 0 : index
    %7 = vector.load %arg3[%c0_5, %c0_6] : memref<1x4xf32, #tpu.memory_space<vmem>>, vector<1x4xf32>
    %cst = arith.constant dense<0.000000e+00> : vector<4xf32>
    %8 = vector.multi_reduction <add>, %6, %cst [0, 1] : vector<8x16x4xf32> to vector<4xf32>
    %9 = vector.shape_cast %8 : vector<4xf32> to vector<1x4xf32>
    %10 = arith.addf %7, %9 : vector<1x4xf32>
    %c0_7 = arith.constant 0 : index
    %c0_8 = arith.constant 0 : index
    %11 = vector.load %arg3[%c0_7, %c0_8] : memref<1x4xf32, #tpu.memory_space<vmem>>, vector<1x4xf32>
    tpu.vector_store %arg3[%c0_7, %c0_8], %10 {strides = array<i32>} : memref<1x4xf32, #tpu.memory_space<vmem>>, vector<1x4xf32>,
    %c0_9 = arith.constant 0 : index
    %c0_10 = arith.constant 0 : index
    %12 = vector.load %arg4[%c0_9, %c0_10] : memref<1x4xf32, #tpu.memory_space<vmem>>, vector<1x4xf32>
    %13 = arith.mulf %6, %6 : vector<8x16x4xf32>
    %cst_11 = arith.constant dense<0.000000e+00> : vector<4xf32>
    %14 = vector.multi_reduction <add>, %13, %cst_11 [0, 1] : vector<8x16x4xf32> to vector<4xf32>
    %15 = vector.shape_cast %14 : vector<4xf32> to vector<1x4xf32>
    %16 = arith.addf %12, %15 : vector<1x4xf32>
    %c0_12 = arith.constant 0 : index
    %c0_13 = arith.constant 0 : index
    %17 = vector.load %arg4[%c0_12, %c0_13] : memref<1x4xf32, #tpu.memory_space<vmem>>, vector<1x4xf32>
    tpu.vector_store %arg4[%c0_12, %c0_13], %16 {strides = array<i32>} : memref<1x4xf32, #tpu.memory_space<vmem>>, vector<1x4xf32>,
    return
  }
  func.func @transform_0(%arg0: i32, %arg1: i32) -> (i32, i32, i32, i32) {
    %c0_i32 = arith.constant 0 : i32
    %c0_i32_0 = arith.constant 0 : i32
    %c0_i32_1 = arith.constant 0 : i32
    return %arg0, %arg1, %c0_i32, %c0_i32_0 : i32, i32, i32, i32
  }
  func.func @transform_1(%arg0: i32, %arg1: i32) -> (i32, i32) {
    %c0_i32 = arith.constant 0 : i32
    %c0_i32_0 = arith.constant 0 : i32
    %c0_i32_1 = arith.constant 0 : i32
    return %c0_i32, %c0_i32_0 : i32, i32
  }
  func.func @transform_2(%arg0: i32, %arg1: i32) -> (i32, i32) {
    %c0_i32 = arith.constant 0 : i32
    %c0_i32_0 = arith.constant 0 : i32
    %c0_i32_1 = arith.constant 0 : i32
    return %c0_i32, %c0_i32_0 : i32, i32
  }
}

</mosaic_0001>

<llo_original>
// kernel: tpu_custom_call.1
$region0: #{tpu_custom_call.1}
  #allocation0 [shape = 'u32[]', space=smem, size = 0x4, offset = 0x4, fixed_abs, tag = 'smem constant byte address 0x4 - core index']
  #allocation1 [shape = 'u32[144,128]{1,0:T(1,128)}', space=vmem, size = 0x12000, scoped, tag = 'internal scratch']
  %s0 = inlined_call_operand.vmem [shape: f32[2,16,16,4], index: 0, kind: input, shape index: {}]
  %s1 = inlined_call_operand.hbm [shape: f32[1,4], index: 1, kind: output, shape index: {0}]
  %s2 = inlined_call_operand.hbm [shape: f32[1,4], index: 2, kind: output, shape index: {1}]
  %3 = xla_tuple %s1, %s2
  %s4 = sld [smem:[#allocation0]]
  $region49: #{tpu_custom_call.1} parent=0
    _
  %s6 = ssub.s32 1, %s4
  %s7 = scalar_select 0, %s6, %s4
  $region1: #{tpu_custom_call.1} parent=0
    #allocation2 [shape = 'u8[512]{0}', space=vmem, size = 0x400, scoped, tag = 'output window, operand 0, single buffered']
    #allocation3 [shape = 's32[2]{0}', space=sflag, size = 0x8, scoped, tag = 'scoped memory for tpu_custom_call.1']
    #allocation4 [shape = 'u8[512]{0}', space=vmem, size = 0x400, scoped, tag = 'output window, operand 1, single buffered']
    #allocation5 [shape = 's32[1]{0}', space=sflag, size = 0x4, scoped, tag = 'scoped memory for tpu_custom_call.1']
    %8 = vsyncpa [#allocation3], 0
    %9 = vsyncpa [#allocation5], 0
    loop: start=0, step=1, limit=6
    $region2: #{tpu_custom_call.1} parent=1 // loop_pre_header
      _
    $region3: #{tpu_custom_call.1} parent=1 // loop_header
      %s11 = sphi 0, %s15
      %p12 = scmp.ge.s32.totalorder %s11, 6
      %s18 = sphi 0, %s30
      %s19 = sphi 0, %s26
      %s20 = sphi 0, %s18
      %s21 = sphi 0, %s19
      %s22 = sphi 0, %s20
      %s23 = sphi 0, %s21
      %s35 = sphi 0, %s37
      %s38 = sphi 0, %s35
      %s39 = sphi 0, %s38
      %s55 = sphi 0, %s39
      %s59 = sphi 0, %s59
      %s61 = sphi 0, %s59
      %s62 = sphi 0, %s61
      %s76 = sphi 0, %s62
      %s80 = sphi 0, %s80
      %s82 = sphi 0, %s80
      %s83 = sphi 0, %s82
      %s97 = sphi 0, %s83
    $region4: #{tpu_custom_call.1} parent=1 // loop_header_branch
      %14 = sbr.rel (%p12) target = $region8
    $region5: #{tpu_custom_call.1} parent=1 // loop_body
      %s16 = ssub.s32 %s11, 1
      %s17 = ssub.s32 %s11, 2
      %s24 = sadd.s32 1, %s19
      %p25 = scmp.ge.s32.totalorder %s24, 2
      %s26 = scalar_select %p25, 0, %s24
      %s27 = sadd.s32 1, %s18
      %s28 = scalar_select %p25, %s27, %s18
      %p29 = scmp.ge.s32.totalorder %s28, 2
      %s30 = scalar_select %p29, 0, %s28
      %s31 = ssub.s32 %s18, %s30
      %s32 = ssub.s32 %s19, %s26
      %s33 = sor.u32 %s31, %s32
      %p34 = scmp.eq.s32.totalorder %s33, 0
      %s36 = sadd.s32 %s35, 1
      %s37 = scalar_select %p34, %s35, %s36
      %p40 = pneg %p34
      %p41 = scmp.eq.s32.totalorder %s11, 3
      %p42 = por %p40, %p41
      %p43 = scmp.ne.s32.totalorder %s35, %s38
      %p44 = scmp.eq.s32.totalorder %s11, 0
      %p45 = por %p43, %p44
      %p46 = scmp.ne.s32.totalorder %s35, %s38
      %p47 = scmp.eq.s32.totalorder %s16, 3
      %p48 = por %p46, %p47
      %p49 = scmp.ne.s32.totalorder %s38, %s39
      %p50 = scmp.eq.s32.totalorder %s16, 0
      %p51 = por %p49, %p50
      %p52 = scmp.ne.s32.totalorder %s38, %s39
      %p53 = scmp.eq.s32.totalorder %s17, 3
      %p54 = por %p52, %p53
      %p56 = scmp.ne.s32.totalorder %s39, %s55
      %p57 = scmp.eq.s32.totalorder %s17, 0
      %p58 = por %p56, %p57
      %s60 = sadd.s32 %s59, 1
      %p63 = scmp.eq.s32.totalorder %s11, 3
      %p64 = scmp.ne.s32.totalorder %s59, %s61
      %p65 = scmp.eq.s32.totalorder %s11, 0
      %p66 = por %p64, %p65
      %p67 = scmp.ne.s32.totalorder %s59, %s61
      %p68 = scmp.eq.s32.totalorder %s16, 3
      %p69 = por %p67, %p68
      %p70 = scmp.ne.s32.totalorder %s61, %s62
      %p71 = scmp.eq.s32.totalorder %s16, 0
      %p72 = por %p70, %p71
      %p73 = scmp.ne.s32.totalorder %s61, %s62
      %p74 = scmp.eq.s32.totalorder %s17, 3
      %p75 = por %p73, %p74
      %p77 = scmp.ne.s32.totalorder %s62, %s76
      %p78 = scmp.eq.s32.totalorder %s17, 0
      %p79 = por %p77, %p78
      %s81 = sadd.s32 %s80, 1
      %p84 = scmp.eq.s32.totalorder %s11, 3
      %p85 = scmp.ne.s32.totalorder %s80, %s82
      %p86 = scmp.eq.s32.totalorder %s11, 0
      %p87 = por %p85, %p86
      %p88 = scmp.ne.s32.totalorder %s80, %s82
      %p89 = scmp.eq.s32.totalorder %s16, 3
      %p90 = por %p88, %p89
      %p91 = scmp.ne.s32.totalorder %s82, %s83
      %p92 = scmp.eq.s32.totalorder %s16, 0
      %p93 = por %p91, %p92
      %p94 = scmp.ne.s32.totalorder %s82, %s83
      %p95 = scmp.eq.s32.totalorder %s17, 3
      %p96 = por %p94, %p95
      %p98 = scmp.ne.s32.totalorder %s83, %s97
      %p99 = scmp.eq.s32.totalorder %s17, 0
      %p100 = por %p98, %p99
      %p101 = scmp.le.s32.totalorder 1, %s11
      %p102 = scmp.lt.s32.totalorder %s11, 5
      %p103 = pnand %p101, %p102
      %p104 = pneg %p103
      // Predicated region
      $region9: #{tpu_custom_call.1} parent=5 // pred_check
        _
      $region10: #{tpu_custom_call.1} parent=5 // pred_check_branch
        %106 = sbr.rel (%p103) target = $region12
      $region11: #{tpu_custom_call.1} parent=5 // pred_region
        %s107 = ssub.s32 %s11, 1
      $region12: #{tpu_custom_call.1} parent=5 // pred_fallthru
        _
      %p108 = scmp.lt.s32.totalorder %s11, 4
      // Predicated region
      $region13: #{tpu_custom_call.1} parent=5 // pred_check
        %p109 = pneg %p108
      $region14: #{tpu_custom_call.1} parent=5 // pred_check_branch
        %111 = sbr.rel (%p109) target = $region16
      $region15: #{tpu_custom_call.1} parent=5 // pred_region
        // Predicated region
        $region17: #{tpu_custom_call.1} parent=15 // pred_check
          %p112 = pneg %p45
        $region18: #{tpu_custom_call.1} parent=15 // pred_check_branch
          %114 = sbr.rel (%p112) target = $region20
        $region19: #{tpu_custom_call.1} parent=15 // pred_region
          %s115 = smul.u32 8, %s19
          %p116 = scmp.lt.s32.totalorder %s18, 1
          %s117 = scalar_select %p116, %s18, 1
          %p118 = scmp.lt.s32.totalorder %s115, 15
          %s119 = scalar_select %p118, %s115, 15
          %s120 = smul.addr %s119, 2
          %s121 = smul.addr %s117, 32
          %s122 = sadd.s32 %s120, %s121
          %s123 = smul.addr %s122, 8
          %s124 = scalar_lea.vmem %s0, %s123
          %s125 = smul.u32 8, %s19
        $region20: #{tpu_custom_call.1} parent=15 // pred_fallthru
          _
      $region16: #{tpu_custom_call.1} parent=5 // pred_fallthru
        _
      %p126 = scmp.le.s32.totalorder 1, %s11
      %p127 = scmp.lt.s32.totalorder %s11, 5
      %p128 = pnand %p126, %p127
      %p129 = pneg %p128
      // Predicated region
      $region21: #{tpu_custom_call.1} parent=5 // pred_check
        _
      $region22: #{tpu_custom_call.1} parent=5 // pred_check_branch
        %131 = sbr.rel (%p128) target = $region24
      $region23: #{tpu_custom_call.1} parent=5 // pred_region
        %s132 = ssub.s32 %s11, 1
        %s133 = smul.u32 8, %s21
        %p134 = scmp.lt.s32.totalorder %s20, 1
        %s135 = scalar_select %p134, %s20, 1
        %p136 = scmp.lt.s32.totalorder %s133, 15
        %s137 = scalar_select %p136, %s133, 15
        %s138 = smul.addr %s137, 2
        %s139 = smul.addr %s135, 32
        %s140 = sadd.s32 %s138, %s139
        %s141 = smul.addr %s140, 8
        %s142 = scalar_lea.vmem %s0, %s141
        %p143 = pneg %p51
        %p144 = pneg %p48
        %p145 = pneg %p72
        %p146 = pneg %p69
        %p147 = pneg %p93
        %p148 = pneg %p90
        %s149 = smul.u32 8, %s21
        %p150 = scmp.lt.s32.totalorder %s20, 1
        %s151 = scalar_select %p150, %s20, 1
        %p152 = scmp.lt.s32.totalorder %s149, 15
        %s153 = scalar_select %p152, %s149, 15
        %s154 = smul.addr %s153, 2
        %s155 = smul.addr %s151, 32
        %s156 = sadd.s32 %s154, %s155
        %s157 = smul.addr %s156, 8
        %s158 = scalar_lea.vmem %s0, %s157
        %s159 = smul.u32 8, %s21
        %p160 = scmp.eq.s32.totalorder %s20, 0
        %p161 = scmp.eq.s32.totalorder %s21, 0
        %p162 = pnand %p160, %p161
        %p163 = pneg %p162
        // Predicated region
        $region25: #{tpu_custom_call.1} parent=23 // pred_check
          _
        $region26: #{tpu_custom_call.1} parent=23 // pred_check_branch
          %165 = sbr.rel (%p162) target = $region28
        $region27: #{tpu_custom_call.1} parent=23 // pred_region
          %vm166 = vcmask 24576
          %167 = vst.msk [vmem:[#allocation2] sm:$0x1] %vm166, 0.0
          %168 = vst.msk [vmem:[#allocation4] sm:$0x1] %vm166, 0.0
        $region28: #{tpu_custom_call.1} parent=23 // pred_fallthru
          _
        %v169 = vld [vmem:[%s158] sm:$0xff]
        %v170 = vld [vmem:[%s158 + $0x8] sm:$0xff]
        %v171 = vld [vmem:[%s158 + $0x10] sm:$0xff]
        %v172 = vld [vmem:[%s158 + $0x18] sm:$0xff]
        %v173 = vld [vmem:[%s158 + $0x20] sm:$0xff]
        %v174 = vld [vmem:[%s158 + $0x28] sm:$0xff]
        %v175 = vld [vmem:[%s158 + $0x30] sm:$0xff]
        %v176 = vld [vmem:[%s158 + $0x38] sm:$0xff]
        %v177 = vld [vmem:[%s158 + $0x40] sm:$0xff]
        %v178 = vld [vmem:[%s158 + $0x48] sm:$0xff]
        %v179 = vld [vmem:[%s158 + $0x50] sm:$0xff]
        %v180 = vld [vmem:[%s158 + $0x58] sm:$0xff]
        %v181 = vld [vmem:[%s158 + $0x60] sm:$0xff]
        %v182 = vld [vmem:[%s158 + $0x68] sm:$0xff]
        %v183 = vld [vmem:[%s158 + $0x70] sm:$0xff]
        %v184 = vld [vmem:[%s158 + $0x78] sm:$0xff]
        %v185 = vld [vmem:[#allocation2] sm:$0x1]
        %vm186 = vcmask 31744
        %v187 = vsel %vm186, %v169, 0.0
        %v188 = vsel %vm186, %v170, 0.0
        %v189 = vadd.f32 %v187, %v188
        %v190 = vsel %vm186, %v171, 0.0
        %v191 = vadd.f32 %v189, %v190
        %v192 = vsel %vm186, %v172, 0.0
        %v193 = vadd.f32 %v191, %v192
        %v194 = vsel %vm186, %v173, 0.0
        %v195 = vadd.f32 %v193, %v194
        %v196 = vsel %vm186, %v174, 0.0
        %v197 = vadd.f32 %v195, %v196
        %v198 = vsel %vm186, %v175, 0.0
        %v199 = vadd.f32 %v197, %v198
        %v200 = vsel %vm186, %v176, 0.0
        %v201 = vadd.f32 %v199, %v200
        %v202 = vsel %vm186, %v177, 0.0
        %v203 = vadd.f32 %v201, %v202
        %v204 = vsel %vm186, %v178, 0.0
        %v205 = vadd.f32 %v203, %v204
        %v206 = vsel %vm186, %v179, 0.0
        %v207 = vadd.f32 %v205, %v206
        %v208 = vsel %vm186, %v180, 0.0
        %v209 = vadd.f32 %v207, %v208
        %v210 = vsel %vm186, %v181, 0.0
        %v211 = vadd.f32 %v209, %v210
        %v212 = vsel %vm186, %v182, 0.0
        %v213 = vadd.f32 %v211, %v212
        %v214 = vsel %vm186, %v183, 0.0
        %v215 = vadd.f32 %v213, %v214
        %v216 = vsel %vm186, %v184, 0.0
        %v217 = vadd.f32 %v215, %v216
        %v218 = vrot.slane %v217, 4
        %v219 = vadd.f32 %v217, %v218
        %v220 = vrot.slane %v219, 2
        %v221 = vadd.f32 %v219, %v220
        %v222 = vrot.slane %v221, 1
        %v223 = vadd.f32 %v221, %v222
        %v224 = vadd.f32 %v185, %v223
        %vm225 = vcmask 24576
        %226 = vst.msk [vmem:[#allocation2] sm:$0x1] %vm225, %v224
        %v227 = vld [vmem:[#allocation4] sm:$0x1]
        %v228 = vmul.f32 %v169, %v169
        %v229 = vmul.f32 %v170, %v170
        %v230 = vmul.f32 %v171, %v171
        %v231 = vmul.f32 %v172, %v172
        %v232 = vmul.f32 %v173, %v173
        %v233 = vmul.f32 %v174, %v174
        %v234 = vmul.f32 %v175, %v175
        %v235 = vmul.f32 %v176, %v176
        %v236 = vmul.f32 %v177, %v177
        %v237 = vmul.f32 %v178, %v178
        %v238 = vmul.f32 %v179, %v179
        %v239 = vmul.f32 %v180, %v180
        %v240 = vmul.f32 %v181, %v181
        %v241 = vmul.f32 %v182, %v182
        %v242 = vmul.f32 %v183, %v183
        %v243 = vmul.f32 %v184, %v184
        %v244 = vsel %vm186, %v228, 0.0
        %v245 = vsel %vm186, %v229, 0.0
        %v246 = vadd.f32 %v244, %v245
        %v247 = vsel %vm186, %v230, 0.0
        %v248 = vadd.f32 %v246, %v247
        %v249 = vsel %vm186, %v231, 0.0
        %v250 = vadd.f32 %v248, %v249
        %v251 = vsel %vm186, %v232, 0.0
        %v252 = vadd.f32 %v250, %v251
        %v253 = vsel %vm186, %v233, 0.0
        %v254 = vadd.f32 %v252, %v253
        %v255 = vsel %vm186, %v234, 0.0
        %v256 = vadd.f32 %v254, %v255
        %v257 = vsel %vm186, %v235, 0.0
        %v258 = vadd.f32 %v256, %v257
        %v259 = vsel %vm186, %v236, 0.0
        %v260 = vadd.f32 %v258, %v259
        %v261 = vsel %vm186, %v237, 0.0
        %v262 = vadd.f32 %v260, %v261
        %v263 = vsel %vm186, %v238, 0.0
        %v264 = vadd.f32 %v262, %v263
        %v265 = vsel %vm186, %v239, 0.0
        %v266 = vadd.f32 %v264, %v265
        %v267 = vsel %vm186, %v240, 0.0
        %v268 = vadd.f32 %v266, %v267
        %v269 = vsel %vm186, %v241, 0.0
        %v270 = vadd.f32 %v268, %v269
        %v271 = vsel %vm186, %v242, 0.0
        %v272 = vadd.f32 %v270, %v271
        %v273 = vsel %vm186, %v243, 0.0
        %v274 = vadd.f32 %v272, %v273
        %v275 = vrot.slane %v274, 4
        %v276 = vadd.f32 %v274, %v275
        %v277 = vrot.slane %v276, 2
        %v278 = vadd.f32 %v276, %v277
        %v279 = vrot.slane %v278, 1
        %v280 = vadd.f32 %v278, %v279
        %v281 = vadd.f32 %v227, %v280
        %282 = vst.msk [vmem:[#allocation4] sm:$0x1] %vm225, %v281
        // Predicated region
        $region29: #{tpu_custom_call.1} parent=23 // pred_check
          %p283 = pneg %p69
        $region30: #{tpu_custom_call.1} parent=23 // pred_check_branch
          %285 = sbr.rel (%p283) target = $region32
        $region31: #{tpu_custom_call.1} parent=23 // pred_region
          %s287 = ssub.s32 16, 16
          %288 = vsyncadd [#allocation3], %s287
          %s290 = sshll.u32 [#allocation2], 4
          %s291 = int_to_ptr.vmem [resolvable:$true] %s290
          %293 = dma.vmem_to_hbm [thread:$0]  %s291, 16, %s1, [#allocation3]
        $region32: #{tpu_custom_call.1} parent=23 // pred_fallthru
          _
        // Predicated region
        $region33: #{tpu_custom_call.1} parent=23 // pred_check
          %p294 = pneg %p90
        $region34: #{tpu_custom_call.1} parent=23 // pred_check_branch
          %296 = sbr.rel (%p294) target = $region36
        $region35: #{tpu_custom_call.1} parent=23 // pred_region
          %s298 = ssub.s32 16, 16
          %299 = vsyncadd [#allocation5], %s298
          %s301 = sshll.u32 [#allocation4], 4
          %s302 = int_to_ptr.vmem [resolvable:$true] %s301
          %304 = dma.vmem_to_hbm [thread:$0]  %s302, 16, %s2, [#allocation5]
        $region36: #{tpu_custom_call.1} parent=23 // pred_fallthru
          _
        // Predicated region
        $region37: #{tpu_custom_call.1} parent=23 // pred_check
          %p305 = pneg %p69
        $region38: #{tpu_custom_call.1} parent=23 // pred_check_branch
          %307 = sbr.rel (%p305) target = $region40
        $region39: #{tpu_custom_call.1} parent=23 // pred_region
          %308 = dma.done [#allocation3], 16
        $region40: #{tpu_custom_call.1} parent=23 // pred_fallthru
          _
        // Predicated region
        $region41: #{tpu_custom_call.1} parent=23 // pred_check
          %p309 = pneg %p90
        $region42: #{tpu_custom_call.1} parent=23 // pred_check_branch
          %311 = sbr.rel (%p309) target = $region44
        $region43: #{tpu_custom_call.1} parent=23 // pred_region
          %312 = dma.done [#allocation5], 16
        $region44: #{tpu_custom_call.1} parent=23 // pred_fallthru
          _
      $region24: #{tpu_custom_call.1} parent=5 // pred_fallthru
        _
      %p313 = scmp.le.s32.totalorder 2, %s11
      // Predicated region
      $region45: #{tpu_custom_call.1} parent=5 // pred_check
        %p314 = pneg %p313
      $region46: #{tpu_custom_call.1} parent=5 // pred_check_branch
        %316 = sbr.rel (%p314) target = $region48
      $region47: #{tpu_custom_call.1} parent=5 // pred_region
        %s317 = ssub.s32 %s11, 2
      $region48: #{tpu_custom_call.1} parent=5 // pred_fallthru
        _
    $region6: #{tpu_custom_call.1} parent=1 // loop_footer
      %s15 = sadd.s32 1, %s11
    $region7: #{tpu_custom_call.1} parent=1 // loop_footer_branch
      %10 = sbr.rel target = $region3
    $region8: #{tpu_custom_call.1} parent=1 // loop_exit
      _
    %318 = vsyncpa [#allocation3], 1
    %s319 = scalar_lea.sflag [#allocation3], 1
    %320 = vsyncpa %s319, 1
    %321 = vsyncpa [#allocation5], 1

</llo_original>
